<compile_context>
chip_gen: v5e
topology: v5e:2x2
jax: 0.10.0
libtpu: 0.0.40
codegen_flags: <defaults>
</compile_context>

<pallas_src>
import numpy as np
import jax
import jax.numpy as jnp
from jax.experimental import pallas as pl
from jax.experimental.pallas import tpu as pltpu

_LANE = 128
_VMEM_LIMIT = 48 * 1024 * 1024        # > 32 MiB scoped default, < v7x 64 MiB physical


def _round_up(x: int, m: int) -> int:
    return ((x + m - 1) // m) * m


def _cdiv(a: int, b: int) -> int:
    return (a + b - 1) // b


# ----------------------------------------------------------------------------
# Fused multi-region sum-of-squared-error (pixel MSE) kernel
# ----------------------------------------------------------------------------

def _make_fused_sse_kernel(n_regions: int):
    def kernel(region_ids_ref, blk_ref, *refs):
        ab_refs = refs[:2 * n_regions]
        o_ref = refs[2 * n_regions]
        i = pl.program_id(0)
        r = region_ids_ref[i]
        # Static <= ~10-way branch: only the owning region's pair is read/squared.
        for rr in range(n_regions):
            @pl.when(r == rr)
            def _(rr=rr):
                a = ab_refs[2 * rr][...].astype(jnp.float32)
                b = ab_refs[2 * rr + 1][...].astype(jnp.float32)
                d = a - b
                dd = d * d
                trows = ab_refs[2 * rr].shape[0]
                # (trows,128) -> (trows//8, 8, 128): summing the leading axis is plain
                # VPU vreg adds -- no per-step cross-lane reduce.
                part = jnp.sum(dd.reshape(trows // 8, 8, _LANE), axis=0)
                o_ref[...] = part.reshape(1, 8, _LANE)
    return kernel


def fused_mse(pairs, max_tile_rows=1024):
    """MSE for every (a, b) pair in a single fused Pallas call.

    Each pair stays a separate kernel input in its NATIVE dtype (cast to f32 happens
    in-kernel), flattened to a lane-dense (rows_k, 128) slab with a per-region tile
    size, so small regions (eye crop, low-res RGB levels) are never inflated to the
    largest region's tile.  Padding per region is < one tile (zeros contribute 0 SSE).
    Every tile writes its own lane-dense (1,8,128) partial sum, so the grid axis is
    "parallel" (both v7x TensorCores usable); the per-region sum happens in JAX on a
    tiny (total_tiles, 8, 128) array.
    """
    n_regions = len(pairs)
    numels = [int(np.prod(a.shape)) for a, _ in pairs]

    slabs, tile_rows_list, n_tiles_list = [], [], []
    for (a, b), numel in zip(pairs, numels):
        rows = _round_up(_cdiv(numel, _LANE), 8)
        n_t = max(1, _cdiv(rows, max_tile_rows))
        trows = _round_up(_cdiv(rows, n_t), 8)       # per-region tile size
        rows_pad = trows * n_t
        pad = rows_pad * _LANE - numel

        def _slab(x):
            f = x.reshape(-1)
            if pad:
                f = jnp.pad(f, (0, pad))
            return f.reshape(rows_pad, _LANE)

        slabs.append((_slab(a), _slab(b)))
        tile_rows_list.append(trows)
        n_tiles_list.append(n_t)

    total_tiles = sum(n_tiles_list)
    region_ids = np.zeros(total_tiles, np.int32)
    blk = np.zeros((n_regions, total_tiles), np.int32)
    starts, off = [], 0
    for rid, n_t in enumerate(n_tiles_list):
        starts.append(off)
        region_ids[off:off + n_t] = rid
        blk[rid, off:off + n_t] = np.arange(n_t)
        blk[rid, off + n_t:] = n_t - 1               # pin index outside own range -> no re-DMA
        off += n_t
    blk_flat = blk.reshape(-1)

    in_specs, operands = [], []
    for rid in range(n_regions):
        trows = tile_rows_list[rid]
        idx_map = (lambda i, rids, blkf, rid=rid:
                   (blkf[rid * total_tiles + i], 0))
        in_specs.append(pl.BlockSpec((trows, _LANE), idx_map))
        in_specs.append(pl.BlockSpec((trows, _LANE), idx_map))
        operands.extend(slabs[rid])

    out = pl.pallas_call(
        _make_fused_sse_kernel(n_regions),
        out_shape=jax.ShapeDtypeStruct((total_tiles, 8, _LANE), jnp.float32),
        grid_spec=pltpu.PrefetchScalarGridSpec(
            num_scalar_prefetch=2,
            grid=(total_tiles,),
            in_specs=in_specs,
            out_specs=pl.BlockSpec((1, 8, _LANE), lambda i, rids, blkf: (i, 0, 0)),
        ),
        compiler_params=pltpu.CompilerParams(
            dimension_semantics=("parallel",),
            vmem_limit_bytes=_VMEM_LIMIT),
    )(jnp.asarray(region_ids), jnp.asarray(blk_flat), *operands)

    results = []
    for rid in range(n_regions):
        s, n_t = starts[rid], n_tiles_list[rid]
        sse = jnp.sum(out[s:s + n_t])
        results.append(sse / jnp.float32(numels[rid]))
    return results


# ----------------------------------------------------------------------------
# Contextual loss kernel (cosine affinity matmul + lane-dense row-max, bf16 on MXU)
# ----------------------------------------------------------------------------

def _cx_kernel(x_ref, yt_ref, o_ref, max_sc):
    j = pl.program_id(1)

    @pl.when(j == 0)
    def _():
        max_sc[...] = jnp.full_like(max_sc, -jnp.inf)

    # (tm, Cf) @ (Cf, tn) bf16 -> f32 on the MXU (RHS pre-transposed in the wrapper).
    sim = jnp.dot(x_ref[...], yt_ref[...], preferred_element_type=jnp.float32)
    # Lane-dense running max: VPU elementwise maxes over 128-lane column groups; no
    # per-step cross-lane (XLU) reduce competing with MXU issue slots.
    m = max_sc[...]
    for g in range(sim.shape[1] // _LANE):
        m = jnp.maximum(m, sim[:, g * _LANE:(g + 1) * _LANE])
    max_sc[...] = m

    @pl.when(j == pl.num_programs(1) - 1)
    def _():
        # the only cross-lane reduce of the i-block; lane-dense (1,1,128) output
        o_ref[...] = jnp.zeros((1, 1, _LANE), jnp.float32) + jnp.sum(
            jnp.max(max_sc[...], axis=-1))


def pallas_contextual(xf, yf, tm=1024, tn=512):
    """Simplified contextual loss between L2-normalized, relu'd feature rows.

    xf: (N, Cf) sibling-crop features, yf: (M, Cf) img-crop features (f32 in, cast to
    bf16 for the MXU; accumulation stays f32).  Returns -log(mean_i max_j <xf_i, yf_j>).
    tm=1024 / tn=512 cut yt HBM re-streaming ~4x and grid-step count ~8x vs 256x256
    tiles; Cf=256 better fills the 2x256^2 MXU depth on v6e/v7x (128 is native on v5e).
    Zero-padded x rows / y columns are harmless because features are non-negative and
    we divide by the true N.
    """
    n, cf = xf.shape
    m, _ = yf.shape
    tm = min(tm, _round_up(n, 8))
    tn = min(tn, _round_up(m, _LANE))
    n_pad, m_pad = _round_up(n, tm), _round_up(m, tn)
    x = jnp.pad(xf, ((0, n_pad - n), (0, 0))).astype(jnp.bfloat16)
    yt = jnp.pad(yf, ((0, m_pad - m), (0, 0))).astype(jnp.bfloat16).T    # (Cf, M)
    ni, nj = n_pad // tm, m_pad // tn

    out = pl.pallas_call(
        _cx_kernel,
        out_shape=jax.ShapeDtypeStruct((ni, 1, _LANE), jnp.float32),
        grid=(ni, nj),
        in_specs=[pl.BlockSpec((tm, cf), lambda i, j: (i, 0)),
                  pl.BlockSpec((cf, tn), lambda i, j: (0, j))],
        out_specs=pl.BlockSpec((1, 1, _LANE), lambda i, j: (i, 0, 0)),
        scratch_shapes=[pltpu.VMEM((tm, _LANE), jnp.float32)],
        compiler_params=pltpu.CompilerParams(
            dimension_semantics=("parallel", "arbitrary"),   # j (reduction) stays last
            vmem_limit_bytes=_VMEM_LIMIT),
    )(x, yt)

    cx = jnp.sum(out[:, 0, 0]) / jnp.float32(n)
    return -jnp.log(jnp.clip(cx, 1e-6, 1.0))


# ----------------------------------------------------------------------------
# Fused noise regularizer kernel (lane-padded, masked, exact cyclic wraps)
# ----------------------------------------------------------------------------

def _make_noise_kernel(h_max: int, w_pad: int):
    def kernel(h_ref, w_ref, n_ref, ow_ref, oh_ref):
        c = pl.program_id(0)
        h = h_ref[c]
        w = w_ref[c]
        n = n_ref[0].astype(jnp.float32)                           # (h_max, w_pad)
        row = jax.lax.broadcasted_iota(jnp.int32, (h_max, w_pad), 0)
        col = jax.lax.broadcasted_iota(jnp.int32, (h_max, w_pad), 1)

        # width (lane) direction: pairs (c-1, c) for c = 1..w-1 ...
        inner_w = ((col >= 1) & (col < w)).astype(jnp.float32)
        s_w = jnp.sum(inner_w * n * pltpu.roll(n, shift=1, axis=1))
        # ... plus the cyclic wrap col 0 <-> col w-1 (exact even when w < w_pad).
        last_col = jnp.sum(jnp.where(col == w - 1, n, 0.0), axis=1, keepdims=True)
        s_w = s_w + jnp.sum(n[:, 0:1] * last_col)

        # height (sublane) direction: pairs (r-1, r) for r = 1..h-1 ...
        inner_h = ((row >= 1) & (row < h)).astype(jnp.float32)
        s_h = jnp.sum(inner_h * n * pltpu.roll(n, shift=1, axis=0))
        # ... plus the cyclic wrap row 0 <-> row h-1: single dynamic-sublane load.
        last_row = n_ref[0, pl.ds(h - 1, 1), :].astype(jnp.float32)   # (1, w_pad)
        s_h = s_h + jnp.sum(n[0:1, :] * last_row)

        ow_ref[...] = jnp.zeros((1, 1, w_pad), jnp.float32) + s_w
        oh_ref[...] = jnp.zeros((1, 1, w_pad), jnp.float32) + s_h

    return kernel


def pallas_noise_reg(noises):
    """StyleGAN noise regularizer: sum over noise tensors of
       mean(n * roll_w(n))^2 + mean(n * roll_h(n))^2  (mean over the full tensor).
    Maps are bucketed by their width rounded up to 128 lanes, so all small levels of
    different widths share ONE lane-dense launch (masks + explicit wrap terms keep the
    cyclic rolls exact despite height/width zero padding), while large levels are not
    inflated to a global max width.
    TODO(synk): the multi-scale downsampling pyramid of the original NoiseRegularizer
    TODO(synk): is not modeled; very large maps could be row-tiled (needs H-roll halo).
    """
    buckets = {}
    for nz in noises:
        buckets.setdefault(_round_up(int(nz.shape[-1]), _LANE), []).append(nz)

    total = jnp.float32(0.0)
    for w_pad, tensors in buckets.items():
        h_max = _round_up(max(int(nz.shape[-2]) for nz in tensors), 8)
        chunks, heights, widths, per_tensor = [], [], [], []
        offset = 0
        for nz in tensors:
            h, w = int(nz.shape[-2]), int(nz.shape[-1])
            maps2d = nz.reshape(-1, h, w)                          # (B*C, H, W) slices
            cnt = maps2d.shape[0]
            chunks.append(jnp.pad(maps2d, ((0, 0), (0, h_max - h), (0, w_pad - w))))
            heights += [h] * cnt
            widths += [w] * cnt
            per_tensor.append((offset, cnt, float(np.prod(nz.shape))))
            offset += cnt
        stack = jnp.concatenate(chunks, axis=0)
        n_chunks = stack.shape[0]

        ow, oh = pl.pallas_call(
            _make_noise_kernel(h_max, w_pad),
            out_shape=(jax.ShapeDtypeStruct((n_chunks, 1, w_pad), jnp.float32),
                       jax.ShapeDtypeStruct((n_chunks, 1, w_pad), jnp.float32)),
            grid_spec=pltpu.PrefetchScalarGridSpec(
                num_scalar_prefetch=2,
                grid=(n_chunks,),
                in_specs=[pl.BlockSpec((1, h_max, w_pad), lambda c, hs, ws: (c, 0, 0))],
                out_specs=[pl.BlockSpec((1, 1, w_pad), lambda c, hs, ws: (c, 0, 0)),
                           pl.BlockSpec((1, 1, w_pad), lambda c, hs, ws: (c, 0, 0))],
            ),
            compiler_params=pltpu.CompilerParams(
                dimension_semantics=("parallel",)),
        )(jnp.asarray(heights, jnp.int32), jnp.asarray(widths, jnp.int32), stack)

        sw, sh = ow[:, 0, 0], oh[:, 0, 0]
        for start, count, numel in per_tensor:
            m_w = jnp.sum(sw[start:start + count]) / numel
            m_h = jnp.sum(sh[start:start + count]) / numel
            total = total + m_w * m_w + m_h * m_h
    return total


# ----------------------------------------------------------------------------
# Glue: synthetic feature projection for the contextual loss
# ----------------------------------------------------------------------------

def _vgg_like_features(crop_nchw, w_feat):
    # TODO(synk): real ContextualLoss uses VGG feature maps; replaced by a fixed
    # deterministic linear projection of pixels to Cf channels + relu + L2 norm.
    b, c, s, _ = crop_nchw.shape
    pix = jnp.transpose(crop_nchw, (0, 2, 3, 1)).reshape(-1, c).astype(jnp.float32)
    f = jax.nn.relu(pix @ w_feat)
    return f / (jnp.linalg.norm(f, axis=-1, keepdims=True) + 1e-6)


# ----------------------------------------------------------------------------
# JointLoss (Pallas-backed)
# ----------------------------------------------------------------------------

class JointLossPallas:
    def __init__(self, weights, target, sibling, sibling_rgbs, feat_w,
                 cx_size, cx_offsets):
        self.weights = dict(weights)
        self.target = target
        self.sibling = jax.lax.stop_gradient(sibling)          # BakedContextualLoss.sibling
        self.sibling_rgbs = [jax.lax.stop_gradient(r) for r in sibling_rgbs]
        self.feat_w = feat_w
        self.cx_size = cx_size
        self.cx_offsets = cx_offsets

    def _contextual_loss(self, img):
        # TODO(synk): per-forward np.random.randint crop replaced by fixed offsets.
        h, w = self.cx_offsets
        s = self.cx_size
        xf = _vgg_like_features(self.sibling[..., h:h + s, w:w + s], self.feat_w)
        yf = _vgg_like_features(img[..., h:h + s, w:w + s], self.feat_w)
        return pallas_contextual(xf, yf)

    def __call__(self, img, degrade=None, noises=None, rgbs=None, rgb_level=None):
        # TODO(synk): the optional `degrade` module inside FaceLoss is not modeled.
        losses = {}

        # All pixel-MSE regions (face + eye + color_transfer levels) -> one fused call.
        pairs = [(img, self.target)]                            # face (pixel-MSE model)
        has_eye = self.weights["eye"] > 0
        if has_eye:
            # TODO(synk): EyeLoss uses detected eye boxes + perceptual net; fixed central
            # crop + pixel MSE here (the XLA slice could be folded into a BlockSpec
            # index_map on the original NCHW tensor to skip this strided copy).
            h, w = img.shape[-2], img.shape[-1]
            r0, r1, c0, c1 = h // 4, h // 2, w // 4, 3 * w // 4
            pairs.append((img[..., r0:r1, c0:c1], self.target[..., r0:r1, c0:c1]))
        ct_range = None
        if self.weights["color_transfer"] > 0:
            assert rgbs is not None
            r_list, i_list = rgbs, self.sibling_rgbs
            if rgb_level is not None:
                r_list, i_list = r_list[:rgb_level + 1], i_list[:rgb_level + 1]
            ct_range = (len(pairs), len(pairs) + len(r_list))
            for r, ir in zip(r_list, i_list):
                pairs.append((r, ir))

        mses = fused_mse(pairs)
        losses["face"] = mses[0]
        if has_eye:
            losses["eye"] = mses[1]
        if ct_range is not None:
            ct = jnp.float32(0.0)
            for k in range(ct_range[0], ct_range[1]):
                ct = ct + mses[k]
            losses["color_transfer"] = ct

        if self.weights["contextual"] > 0:
            losses["contextual"] = self._contextual_loss(img)
        if self.weights["noise"] > 0:
            assert noises is not None
            losses["noise"] = pallas_noise_reg(noises)

        total_loss = jnp.float32(0.0)
        for name, loss in losses.items():
            total_loss = total_loss + self.weights[name] * loss
        return total_loss, losses


# ----------------------------------------------------------------------------
# Example run
# ----------------------------------------------------------------------------

if __name__ == "__main__":
    key = jax.random.PRNGKey(0)
    keys = jax.random.split(key, 10)
    B, C, H, W = 2, 3, 32, 32
    CF = 128   # synthetic feature width; use 256 on v6e/v7x to fill the 2x256^2 MXU depth

    img = jax.random.normal(keys[0], (B, C, H, W), jnp.float32)
    target = jax.random.normal(keys[1], (B, C, H, W), jnp.float32)
    sibling = jax.random.normal(keys[2], (B, C, H, W), jnp.float32)
    sibling_rgbs = [jax.random.normal(keys[3], (B, 3, 16, 16), jnp.float32),
                    jax.random.normal(keys[4], (B, 3, 32, 32), jnp.float32)]
    rgbs = [jax.random.normal(keys[5], (B, 3, 16, 16), jnp.float32),
            jax.random.normal(keys[6], (B, 3, 32, 32), jnp.float32)]
    noises = [jax.random.normal(keys[7], (1, 1, 32, 128), jnp.float32),
              jax.random.normal(keys[8], (1, 1, 64, 128), jnp.float32)]
    feat_w = 0.1 * jax.random.normal(keys[9], (C, CF), jnp.float32)

    # BakedContextualLoss crop: size scaled down 256 -> 16 for the small example.
    cx_size = 16
    rng = np.random.default_rng(0)
    cx_offsets = tuple(int(v) for v in rng.integers(0, W - cx_size, size=2))

    weights = {"face": 1.0, "eye": 0.5, "contextual": 0.1,
               "color_transfer": 0.05, "noise": 1e-3}

    joint = JointLossPallas(weights, target, sibling, sibling_rgbs, feat_w,
                            cx_size, cx_offsets)

    total, losses = joint(img, noises=noises, rgbs=rgbs)
    total = jax.block_until_ready(total)
    for v in losses.values():
        jax.block_until_ready(v)
    assert np.isfinite(float(total))
    print("KERNEL_OK")
</pallas_src>

<mosaic_0001>
module attributes {stable_mosaic.version = 11 : i64} {
  func.func @kernel(%arg0: i32, %arg1: memref<4xi32, #tpu.memory_space<smem>>, %arg2: memref<16xi32, #tpu.memory_space<smem>>, %arg3: memref<48x128xf32, #tpu.memory_space<vmem>>, %arg4: memref<48x128xf32, #tpu.memory_space<vmem>>, %arg5: memref<8x128xf32, #tpu.memory_space<vmem>>, %arg6: memref<8x128xf32, #tpu.memory_space<vmem>>, %arg7: memref<16x128xf32, #tpu.memory_space<vmem>>, %arg8: memref<16x128xf32, #tpu.memory_space<vmem>>, %arg9: memref<48x128xf32, #tpu.memory_space<vmem>>, %arg10: memref<48x128xf32, #tpu.memory_space<vmem>>, %arg11: memref<1x8x128xf32, #tpu.memory_space<vmem>>) attributes {dimension_semantics = [#tpu.dimension_semantics<parallel>], iteration_bounds = array<i64: 4>, scalar_prefetch = 2 : i64, scratch_operands = 0 : i64, tpu.core_type = #tpu.core_type<tc>, window_params = [{transform_indices = @transform_0, window_bounds = array<i64: 48, 128>}, {transform_indices = @transform_1, window_bounds = array<i64: 48, 128>}, {transform_indices = @transform_2, window_bounds = array<i64: 8, 128>}, {transform_indices = @transform_3, window_bounds = array<i64: 8, 128>}, {transform_indices = @transform_4, window_bounds = array<i64: 16, 128>}, {transform_indices = @transform_5, window_bounds = array<i64: 16, 128>}, {transform_indices = @transform_6, window_bounds = array<i64: 48, 128>}, {transform_indices = @transform_7, window_bounds = array<i64: 48, 128>}, {transform_indices = @transform_8, window_bounds = array<i64: 1, 8, 128>}]} {
    %0 = arith.index_cast %arg0 : i32 to index
    %1 = memref.load %arg1[%0] : memref<4xi32, #tpu.memory_space<smem>>
    %c0_i32 = arith.constant 0 : i32
    %2 = arith.cmpi eq, %1, %c0_i32 : i32
    %3 = arith.extui %2 : i1 to i32
    %c0_i32_0 = arith.constant 0 : i32
    %4 = arith.cmpi ne, %3, %c0_i32_0 : i32
    scf.if %4 {
      %c0 = arith.constant 0 : index
      %c0_4 = arith.constant 0 : index
      %14 = vector.load %arg3[%c0, %c0_4] : memref<48x128xf32, #tpu.memory_space<vmem>>, vector<48x128xf32>
      %c0_5 = arith.constant 0 : index
      %c0_6 = arith.constant 0 : index
      %15 = vector.load %arg4[%c0_5, %c0_6] : memref<48x128xf32, #tpu.memory_space<vmem>>, vector<48x128xf32>
      %16 = arith.subf %14, %15 : vector<48x128xf32>
      %17 = arith.mulf %16, %16 : vector<48x128xf32>
      %18 = vector.shape_cast %17 : vector<48x128xf32> to vector<6x8x128xf32>
      %cst = arith.constant dense<0.000000e+00> : vector<8x128xf32>
      %19 = vector.multi_reduction <add>, %18, %cst [0] : vector<6x8x128xf32> to vector<8x128xf32>
      %20 = vector.shape_cast %19 : vector<8x128xf32> to vector<1x8x128xf32>
      %c0_7 = arith.constant 0 : index
      %c0_8 = arith.constant 0 : index
      %c0_9 = arith.constant 0 : index
      %21 = vector.load %arg11[%c0_7, %c0_8, %c0_9] : memref<1x8x128xf32, #tpu.memory_space<vmem>>, vector<1x8x128xf32>
      tpu.vector_store %arg11[%c0_7, %c0_8, %c0_9], %20 {strides = array<i32>} : memref<1x8x128xf32, #tpu.memory_space<vmem>>, vector<1x8x128xf32>,
    } else {
    }
    %c1_i32 = arith.constant 1 : i32
    %5 = arith.cmpi eq, %1, %c1_i32 : i32
    %6 = arith.extui %5 : i1 to i32
    %c0_i32_1 = arith.constant 0 : i32
    %7 = arith.cmpi ne, %6, %c0_i32_1 : i32
    scf.if %7 {
      %c0 = arith.constant 0 : index
      %c0_4 = arith.constant 0 : index
      %14 = vector.load %arg5[%c0, %c0_4] : memref<8x128xf32, #tpu.memory_space<vmem>>, vector<8x128xf32>
      %c0_5 = arith.constant 0 : index
      %c0_6 = arith.constant 0 : index
      %15 = vector.load %arg6[%c0_5, %c0_6] : memref<8x128xf32, #tpu.memory_space<vmem>>, vector<8x128xf32>
      %16 = arith.subf %14, %15 : vector<8x128xf32>
      %17 = arith.mulf %16, %16 : vector<8x128xf32>
      %18 = vector.shape_cast %17 : vector<8x128xf32> to vector<1x8x128xf32>
      %cst = arith.constant dense<0.000000e+00> : vector<8x128xf32>
      %19 = vector.multi_reduction <add>, %18, %cst [0] : vector<1x8x128xf32> to vector<8x128xf32>
      %20 = vector.shape_cast %19 : vector<8x128xf32> to vector<1x8x128xf32>
      %c0_7 = arith.constant 0 : index
      %c0_8 = arith.constant 0 : index
      %c0_9 = arith.constant 0 : index
      %21 = vector.load %arg11[%c0_7, %c0_8, %c0_9] : memref<1x8x128xf32, #tpu.memory_space<vmem>>, vector<1x8x128xf32>
      tpu.vector_store %arg11[%c0_7, %c0_8, %c0_9], %20 {strides = array<i32>} : memref<1x8x128xf32, #tpu.memory_space<vmem>>, vector<1x8x128xf32>,
    } else {
    }
    %c2_i32 = arith.constant 2 : i32
    %8 = arith.cmpi eq, %1, %c2_i32 : i32
    %9 = arith.extui %8 : i1 to i32
    %c0_i32_2 = arith.constant 0 : i32
    %10 = arith.cmpi ne, %9, %c0_i32_2 : i32
    scf.if %10 {
      %c0 = arith.constant 0 : index
      %c0_4 = arith.constant 0 : index
      %14 = vector.load %arg7[%c0, %c0_4] : memref<16x128xf32, #tpu.memory_space<vmem>>, vector<16x128xf32>
      %c0_5 = arith.constant 0 : index
      %c0_6 = arith.constant 0 : index
      %15 = vector.load %arg8[%c0_5, %c0_6] : memref<16x128xf32, #tpu.memory_space<vmem>>, vector<16x128xf32>
      %16 = arith.subf %14, %15 : vector<16x128xf32>
      %17 = arith.mulf %16, %16 : vector<16x128xf32>
      %18 = vector.shape_cast %17 : vector<16x128xf32> to vector<2x8x128xf32>
      %cst = arith.constant dense<0.000000e+00> : vector<8x128xf32>
      %19 = vector.multi_reduction <add>, %18, %cst [0] : vector<2x8x128xf32> to vector<8x128xf32>
      %20 = vector.shape_cast %19 : vector<8x128xf32> to vector<1x8x128xf32>
      %c0_7 = arith.constant 0 : index
      %c0_8 = arith.constant 0 : index
      %c0_9 = arith.constant 0 : index
      %21 = vector.load %arg11[%c0_7, %c0_8, %c0_9] : memref<1x8x128xf32, #tpu.memory_space<vmem>>, vector<1x8x128xf32>
      tpu.vector_store %arg11[%c0_7, %c0_8, %c0_9], %20 {strides = array<i32>} : memref<1x8x128xf32, #tpu.memory_space<vmem>>, vector<1x8x128xf32>,
    } else {
    }
    %c3_i32 = arith.constant 3 : i32
    %11 = arith.cmpi eq, %1, %c3_i32 : i32
    %12 = arith.extui %11 : i1 to i32
    %c0_i32_3 = arith.constant 0 : i32
    %13 = arith.cmpi ne, %12, %c0_i32_3 : i32
    scf.if %13 {
      %c0 = arith.constant 0 : index
      %c0_4 = arith.constant 0 : index
      %14 = vector.load %arg9[%c0, %c0_4] : memref<48x128xf32, #tpu.memory_space<vmem>>, vector<48x128xf32>
      %c0_5 = arith.constant 0 : index
      %c0_6 = arith.constant 0 : index
      %15 = vector.load %arg10[%c0_5, %c0_6] : memref<48x128xf32, #tpu.memory_space<vmem>>, vector<48x128xf32>
      %16 = arith.subf %14, %15 : vector<48x128xf32>
      %17 = arith.mulf %16, %16 : vector<48x128xf32>
      %18 = vector.shape_cast %17 : vector<48x128xf32> to vector<6x8x128xf32>
      %cst = arith.constant dense<0.000000e+00> : vector<8x128xf32>
      %19 = vector.multi_reduction <add>, %18, %cst [0] : vector<6x8x128xf32> to vector<8x128xf32>
      %20 = vector.shape_cast %19 : vector<8x128xf32> to vector<1x8x128xf32>
      %c0_7 = arith.constant 0 : index
      %c0_8 = arith.constant 0 : index
      %c0_9 = arith.constant 0 : index
      %21 = vector.load %arg11[%c0_7, %c0_8, %c0_9] : memref<1x8x128xf32, #tpu.memory_space<vmem>>, vector<1x8x128xf32>
      tpu.vector_store %arg11[%c0_7, %c0_8, %c0_9], %20 {strides = array<i32>} : memref<1x8x128xf32, #tpu.memory_space<vmem>>, vector<1x8x128xf32>,
    } else {
    }
    return
  }
  func.func @transform_0(%arg0: i32, %arg1: memref<4xi32, #tpu.memory_space<smem>>, %arg2: memref<16xi32, #tpu.memory_space<smem>>) -> (i32, i32) {
    %c0_i32 = arith.constant 0 : i32
    %0 = arith.addi %c0_i32, %arg0 : i32
    %1 = arith.index_cast %0 : i32 to index
    %2 = memref.load %arg2[%1] : memref<16xi32, #tpu.memory_space<smem>>
    %c0_i32_0 = arith.constant 0 : i32
    %c0_i32_1 = arith.constant 0 : i32
    return %2, %c0_i32_0 : i32, i32
  }
  func.func @transform_1(%arg0: i32, %arg1: memref<4xi32, #tpu.memory_space<smem>>, %arg2: memref<16xi32, #tpu.memory_space<smem>>) -> (i32, i32) {
    %c0_i32 = arith.constant 0 : i32
    %0 = arith.addi %c0_i32, %arg0 : i32
    %1 = arith.index_cast %0 : i32 to index
    %2 = memref.load %arg2[%1] : memref<16xi32, #tpu.memory_space<smem>>
    %c0_i32_0 = arith.constant 0 : i32
    %c0_i32_1 = arith.constant 0 : i32
    return %2, %c0_i32_0 : i32, i32
  }
  func.func @transform_2(%arg0: i32, %arg1: memref<4xi32, #tpu.memory_space<smem>>, %arg2: memref<16xi32, #tpu.memory_space<smem>>) -> (i32, i32) {
    %c4_i32 = arith.constant 4 : i32
    %0 = arith.addi %c4_i32, %arg0 : i32
    %1 = arith.index_cast %0 : i32 to index
    %2 = memref.load %arg2[%1] : memref<16xi32, #tpu.memory_space<smem>>
    %c0_i32 = arith.constant 0 : i32
    %c0_i32_0 = arith.constant 0 : i32
    return %2, %c0_i32 : i32, i32
  }
  func.func @transform_3(%arg0: i32, %arg1: memref<4xi32, #tpu.memory_space<smem>>, %arg2: memref<16xi32, #tpu.memory_space<smem>>) -> (i32, i32) {
    %c4_i32 = arith.constant 4 : i32
    %0 = arith.addi %c4_i32, %arg0 : i32
    %1 = arith.index_cast %0 : i32 to index
    %2 = memref.load %arg2[%1] : memref<16xi32, #tpu.memory_space<smem>>
    %c0_i32 = arith.constant 0 : i32
    %c0_i32_0 = arith.constant 0 : i32
    return %2, %c0_i32 : i32, i32
  }
  func.func @transform_4(%arg0: i32, %arg1: memref<4xi32, #tpu.memory_space<smem>>, %arg2: memref<16xi32, #tpu.memory_space<smem>>) -> (i32, i32) {
    %c8_i32 = arith.constant 8 : i32
    %0 = arith.addi %c8_i32, %arg0 : i32
    %1 = arith.index_cast %0 : i32 to index
    %2 = memref.load %arg2[%1] : memref<16xi32, #tpu.memory_space<smem>>
    %c0_i32 = arith.constant 0 : i32
    %c0_i32_0 = arith.constant 0 : i32
    return %2, %c0_i32 : i32, i32
  }
  func.func @transform_5(%arg0: i32, %arg1: memref<4xi32, #tpu.memory_space<smem>>, %arg2: memref<16xi32, #tpu.memory_space<smem>>) -> (i32, i32) {
    %c8_i32 = arith.constant 8 : i32
    %0 = arith.addi %c8_i32, %arg0 : i32
    %1 = arith.index_cast %0 : i32 to index
    %2 = memref.load %arg2[%1] : memref<16xi32, #tpu.memory_space<smem>>
    %c0_i32 = arith.constant 0 : i32
    %c0_i32_0 = arith.constant 0 : i32
    return %2, %c0_i32 : i32, i32
  }
  func.func @transform_6(%arg0: i32, %arg1: memref<4xi32, #tpu.memory_space<smem>>, %arg2: memref<16xi32, #tpu.memory_space<smem>>) -> (i32, i32) {
    %c12_i32 = arith.constant 12 : i32
    %0 = arith.addi %c12_i32, %arg0 : i32
    %1 = arith.index_cast %0 : i32 to index
    %2 = memref.load %arg2[%1] : memref<16xi32, #tpu.memory_space<smem>>
    %c0_i32 = arith.constant 0 : i32
    %c0_i32_0 = arith.constant 0 : i32
    return %2, %c0_i32 : i32, i32
  }
  func.func @transform_7(%arg0: i32, %arg1: memref<4xi32, #tpu.memory_space<smem>>, %arg2: memref<16xi32, #tpu.memory_space<smem>>) -> (i32, i32) {
    %c12_i32 = arith.constant 12 : i32
    %0 = arith.addi %c12_i32, %arg0 : i32
    %1 = arith.index_cast %0 : i32 to index
    %2 = memref.load %arg2[%1] : memref<16xi32, #tpu.memory_space<smem>>
    %c0_i32 = arith.constant 0 : i32
    %c0_i32_0 = arith.constant 0 : i32
    return %2, %c0_i32 : i32, i32
  }
  func.func @transform_8(%arg0: i32, %arg1: memref<4xi32, #tpu.memory_space<smem>>, %arg2: memref<16xi32, #tpu.memory_space<smem>>) -> (i32, i32, i32) {
    %c0_i32 = arith.constant 0 : i32
    %c0_i32_0 = arith.constant 0 : i32
    %c0_i32_1 = arith.constant 0 : i32
    return %arg0, %c0_i32, %c0_i32_0 : i32, i32, i32
  }
}

</mosaic_0001>

<llo_original>
// kernel: tpu_custom_call.1
$region0: #{tpu_custom_call.1}
  #allocation0 [shape = 'u32[]', space=smem, size = 0x4, offset = 0x4, fixed_abs, tag = 'smem constant byte address 0x4 - core index']
  #allocation1 [shape = 'u32[72,128]{1,0:T(1,128)}', space=vmem, size = 0x9000, scoped, tag = 'internal scratch']
  #allocation2 [shape = 's32[1]{0}', space=sflag, size = 0x4, scoped, tag = 'scoped memory for tpu_custom_call.1']
  #allocation3 [shape = 'u8[512]{0}', space=smem, size = 0x200, scoped, tag = 'prefetched SMEM operand 0']
  #allocation4 [shape = 'u8[512]{0}', space=smem, size = 0x200, scoped, tag = 'prefetched SMEM operand 1']
  %s0 = inlined_call_operand.hbm [shape: s32[4], index: 0, kind: input, shape index: {}]
  %s1 = inlined_call_operand.hbm [shape: s32[16], index: 1, kind: input, shape index: {}]
  %s2 = inlined_call_operand.hbm [shape: f32[48,128], index: 2, kind: input, shape index: {}]
  %s3 = inlined_call_operand.hbm [shape: f32[48,128], index: 3, kind: input, shape index: {}]
  %s4 = inlined_call_operand.hbm [shape: f32[8,128], index: 4, kind: input, shape index: {}]
  %s5 = inlined_call_operand.hbm [shape: f32[8,128], index: 5, kind: input, shape index: {}]
  %s6 = inlined_call_operand.hbm [shape: f32[16,128], index: 6, kind: input, shape index: {}]
  %s7 = inlined_call_operand.hbm [shape: f32[16,128], index: 7, kind: input, shape index: {}]
  %s8 = inlined_call_operand.hbm [shape: f32[48,128], index: 8, kind: input, shape index: {}]
  %s9 = inlined_call_operand.hbm [shape: f32[48,128], index: 9, kind: input, shape index: {}]
  %s10 = inlined_call_operand.hbm [shape: f32[4,8,128], index: 10, kind: output, shape index: {}]
  %s11 = sld [smem:[#allocation0]]
  $region113: #{tpu_custom_call.1} parent=0
    _
  %s13 = ssub.s32 1, %s11
  %s14 = scalar_select 0, %s13, %s11
  %s16 = sshll.u32 %s0, 4
  %s17 = int_to_ptr.hbm [resolvable:$true] %s16
  %19 = dma.hbm_to_smem %s17, 16, [#allocation3], [#allocation2]
  %s21 = sshll.u32 %s1, 4
  %s22 = int_to_ptr.hbm [resolvable:$true] %s21
  %24 = dma.hbm_to_smem %s22, 16, [#allocation4], [#allocation2]
  %26 = dma.done [#allocation2], 32
  %27 = sfence
  $region1: #{tpu_custom_call.1} parent=0
    #allocation5 [shape = 'u8[49152]{0}', space=vmem, size = 0xc000, scoped, tag = 'input window, operand 2']
    #allocation6 [shape = 's32[2]{0}', space=sflag, size = 0x8, scoped, tag = 'scoped memory for tpu_custom_call.1']
    #allocation7 [shape = 's32[2]{0}', space=sflag, size = 0x8, scoped, tag = 'scoped memory for tpu_custom_call.1']
    #allocation8 [shape = 'u8[49152]{0}', space=vmem, size = 0xc000, scoped, tag = 'input window, operand 3']
    #allocation9 [shape = 's32[2]{0}', space=sflag, size = 0x8, scoped, tag = 'scoped memory for tpu_custom_call.1']
    #allocation10 [shape = 'u8[8192]{0}', space=vmem, size = 0x2000, scoped, tag = 'input window, operand 4']
    #allocation11 [shape = 'u8[8192]{0}', space=vmem, size = 0x2000, scoped, tag = 'input window, operand 5']
    #allocation12 [shape = 's32[2]{0}', space=sflag, size = 0x8, scoped, tag = 'scoped memory for tpu_custom_call.1']
    #allocation13 [shape = 'u8[16384]{0}', space=vmem, size = 0x4000, scoped, tag = 'input window, operand 6']
    #allocation14 [shape = 'u8[16384]{0}', space=vmem, size = 0x4000, scoped, tag = 'input window, operand 7']
    #allocation15 [shape = 's32[2]{0}', space=sflag, size = 0x8, scoped, tag = 'scoped memory for tpu_custom_call.1']
    #allocation16 [shape = 'u8[49152]{0}', space=vmem, size = 0xc000, scoped, tag = 'input window, operand 8']
    #allocation17 [shape = 'u8[49152]{0}', space=vmem, size = 0xc000, scoped, tag = 'input window, operand 9']
    #allocation18 [shape = 's32[2]{0}', space=sflag, size = 0x8, scoped, tag = 'scoped memory for tpu_custom_call.1']
    #allocation19 [shape = 'u8[8192]{0}', space=vmem, size = 0x2000, scoped, tag = 'output window, operand 0']
    %28 = vsyncpa [#allocation6], 0
    %s29 = scalar_lea.sflag [#allocation6], 1
    %30 = vsyncpa %s29, 0
    %31 = vsyncpa [#allocation9], 0
    %s32 = scalar_lea.sflag [#allocation9], 1
    %33 = vsyncpa %s32, 0
    %34 = vsyncpa [#allocation12], 0
    %s35 = scalar_lea.sflag [#allocation12], 1
    %36 = vsyncpa %s35, 0
    %37 = vsyncpa [#allocation15], 0
    %s38 = scalar_lea.sflag [#allocation15], 1
    %39 = vsyncpa %s38, 0
    %40 = vsyncpa [#allocation18], 0
    %s41 = scalar_lea.sflag [#allocation18], 1
    %42 = vsyncpa %s41, 0
    %43 = vsyncpa [#allocation7], 0
    %s44 = scalar_lea.sflag [#allocation7], 1
    %45 = vsyncpa %s44, 0
    loop: start=0, step=1, limit=6
    $region2: #{tpu_custom_call.1} parent=1 // loop_pre_header
      _
    $region3: #{tpu_custom_call.1} parent=1 // loop_header
      %s47 = sphi 0, %s51
      %p48 = scmp.ge.s32.totalorder %s47, 6
      %s59 = sphi 0, %s61
      %s62 = sphi 0, %s59
      %s63 = sphi 0, %s62
      %s79 = sphi 0, %s63
      %s87 = sphi 0, %s89
      %s90 = sphi 0, %s87
      %s91 = sphi 0, %s90
      %s107 = sphi 0, %s91
      %s117 = sphi 0, %s119
      %s120 = sphi 0, %s117
      %s121 = sphi 0, %s120
      %s137 = sphi 0, %s121
      %s147 = sphi 0, %s149
      %s150 = sphi 0, %s147
      %s151 = sphi 0, %s150
      %s167 = sphi 0, %s151
      %s177 = sphi 0, %s179
      %s180 = sphi 0, %s177
      %s181 = sphi 0, %s180
      %s197 = sphi 0, %s181
      %s207 = sphi 0, %s209
      %s210 = sphi 0, %s207
      %s211 = sphi 0, %s210
      %s227 = sphi 0, %s211
      %s237 = sphi 0, %s239
      %s240 = sphi 0, %s237
      %s241 = sphi 0, %s240
      %s257 = sphi 0, %s241
      %s267 = sphi 0, %s269
      %s270 = sphi 0, %s267
      %s271 = sphi 0, %s270
      %s287 = sphi 0, %s271
      %s293 = sphi 0, %s295
      %s296 = sphi 0, %s293
      %s297 = sphi 0, %s296
      %s313 = sphi 0, %s297
    $region4: #{tpu_custom_call.1} parent=1 // loop_header_branch
      %50 = sbr.rel (%p48) target = $region8
    $region5: #{tpu_custom_call.1} parent=1 // loop_body
      %s52 = ssub.s32 %s47, 1
      %s53 = ssub.s32 %s47, 2
      %s54 = sadd.s32 %s47, 1
      %s55 = sld [smem:[#allocation4 + %s47]]
      %s56 = sld [smem:[#allocation4 + %s54]]
      %s57 = ssub.s32 %s55, %s56
      %p58 = scmp.eq.s32.totalorder %s57, 0
      %s60 = sadd.s32 %s59, 1
      %s61 = scalar_select %p58, %s59, %s60
      %p64 = pneg %p58
      %p65 = scmp.eq.s32.totalorder %s47, 3
      %p66 = por %p64, %p65
      %p67 = scmp.ne.s32.totalorder %s59, %s62
      %p68 = scmp.eq.s32.totalorder %s47, 0
      %p69 = por %p67, %p68
      %p70 = scmp.ne.s32.totalorder %s59, %s62
      %p71 = scmp.eq.s32.totalorder %s52, 3
      %p72 = por %p70, %p71
      %p73 = scmp.ne.s32.totalorder %s62, %s63
      %p74 = scmp.eq.s32.totalorder %s52, 0
      %p75 = por %p73, %p74
      %p76 = scmp.ne.s32.totalorder %s62, %s63
      %p77 = scmp.eq.s32.totalorder %s53, 3
      %p78 = por %p76, %p77
      %p80 = scmp.ne.s32.totalorder %s63, %s79
      %p81 = scmp.eq.s32.totalorder %s53, 0
      %p82 = por %p80, %p81
      %s83 = sld [smem:[#allocation4 + %s47]]
      %s84 = sld [smem:[#allocation4 + %s54]]
      %s85 = ssub.s32 %s83, %s84
      %p86 = scmp.eq.s32.totalorder %s85, 0
      %s88 = sadd.s32 %s87, 1
      %s89 = scalar_select %p86, %s87, %s88
      %p92 = pneg %p86
      %p93 = scmp.eq.s32.totalorder %s47, 3
      %p94 = por %p92, %p93
      %p95 = scmp.ne.s32.totalorder %s87, %s90
      %p96 = scmp.eq.s32.totalorder %s47, 0
      %p97 = por %p95, %p96
      %p98 = scmp.ne.s32.totalorder %s87, %s90
      %p99 = scmp.eq.s32.totalorder %s52, 3
      %p100 = por %p98, %p99
      %p101 = scmp.ne.s32.totalorder %s90, %s91
      %p102 = scmp.eq.s32.totalorder %s52, 0
      %p103 = por %p101, %p102
      %p104 = scmp.ne.s32.totalorder %s90, %s91
      %p105 = scmp.eq.s32.totalorder %s53, 3
      %p106 = por %p104, %p105
      %p108 = scmp.ne.s32.totalorder %s91, %s107
      %p109 = scmp.eq.s32.totalorder %s53, 0
      %p110 = por %p108, %p109
      %s111 = sadd.s32 %s47, 4
      %s112 = sld [smem:[#allocation4 + %s111]]
      %s113 = sadd.s32 %s54, 4
      %s114 = sld [smem:[#allocation4 + %s113]]
      %s115 = ssub.s32 %s112, %s114
      %p116 = scmp.eq.s32.totalorder %s115, 0
      %s118 = sadd.s32 %s117, 1
      %s119 = scalar_select %p116, %s117, %s118
      %p122 = pneg %p116
      %p123 = scmp.eq.s32.totalorder %s47, 3
      %p124 = por %p122, %p123
      %p125 = scmp.ne.s32.totalorder %s117, %s120
      %p126 = scmp.eq.s32.totalorder %s47, 0
      %p127 = por %p125, %p126
      %p128 = scmp.ne.s32.totalorder %s117, %s120
      %p129 = scmp.eq.s32.totalorder %s52, 3
      %p130 = por %p128, %p129
      %p131 = scmp.ne.s32.totalorder %s120, %s121
      %p132 = scmp.eq.s32.totalorder %s52, 0
      %p133 = por %p131, %p132
      %p134 = scmp.ne.s32.totalorder %s120, %s121
      %p135 = scmp.eq.s32.totalorder %s53, 3
      %p136 = por %p134, %p135
      %p138 = scmp.ne.s32.totalorder %s121, %s137
      %p139 = scmp.eq.s32.totalorder %s53, 0
      %p140 = por %p138, %p139
      %s141 = sadd.s32 %s47, 4
      %s142 = sld [smem:[#allocation4 + %s141]]
      %s143 = sadd.s32 %s54, 4
      %s144 = sld [smem:[#allocation4 + %s143]]
      %s145 = ssub.s32 %s142, %s144
      %p146 = scmp.eq.s32.totalorder %s145, 0
      %s148 = sadd.s32 %s147, 1
      %s149 = scalar_select %p146, %s147, %s148
      %p152 = pneg %p146
      %p153 = scmp.eq.s32.totalorder %s47, 3
      %p154 = por %p152, %p153
      %p155 = scmp.ne.s32.totalorder %s147, %s150
      %p156 = scmp.eq.s32.totalorder %s47, 0
      %p157 = por %p155, %p156
      %p158 = scmp.ne.s32.totalorder %s147, %s150
      %p159 = scmp.eq.s32.totalorder %s52, 3
      %p160 = por %p158, %p159
      %p161 = scmp.ne.s32.totalorder %s150, %s151
      %p162 = scmp.eq.s32.totalorder %s52, 0
      %p163 = por %p161, %p162
      %p164 = scmp.ne.s32.totalorder %s150, %s151
      %p165 = scmp.eq.s32.totalorder %s53, 3
      %p166 = por %p164, %p165
      %p168 = scmp.ne.s32.totalorder %s151, %s167
      %p169 = scmp.eq.s32.totalorder %s53, 0
      %p170 = por %p168, %p169
      %s171 = sadd.s32 %s47, 8
      %s172 = sld [smem:[#allocation4 + %s171]]
      %s173 = sadd.s32 %s54, 8
      %s174 = sld [smem:[#allocation4 + %s173]]
      %s175 = ssub.s32 %s172, %s174
      %p176 = scmp.eq.s32.totalorder %s175, 0
      %s178 = sadd.s32 %s177, 1
      %s179 = scalar_select %p176, %s177, %s178
      %p182 = pneg %p176
      %p183 = scmp.eq.s32.totalorder %s47, 3
      %p184 = por %p182, %p183
      %p185 = scmp.ne.s32.totalorder %s177, %s180
      %p186 = scmp.eq.s32.totalorder %s47, 0
      %p187 = por %p185, %p186
      %p188 = scmp.ne.s32.totalorder %s177, %s180
      %p189 = scmp.eq.s32.totalorder %s52, 3
      %p190 = por %p188, %p189
      %p191 = scmp.ne.s32.totalorder %s180, %s181
      %p192 = scmp.eq.s32.totalorder %s52, 0
      %p193 = por %p191, %p192
      %p194 = scmp.ne.s32.totalorder %s180, %s181
      %p195 = scmp.eq.s32.totalorder %s53, 3
      %p196 = por %p194, %p195
      %p198 = scmp.ne.s32.totalorder %s181, %s197
      %p199 = scmp.eq.s32.totalorder %s53, 0
      %p200 = por %p198, %p199
      %s201 = sadd.s32 %s47, 8
      %s202 = sld [smem:[#allocation4 + %s201]]
      %s203 = sadd.s32 %s54, 8
      %s204 = sld [smem:[#allocation4 + %s203]]
      %s205 = ssub.s32 %s202, %s204
      %p206 = scmp.eq.s32.totalorder %s205, 0
      %s208 = sadd.s32 %s207, 1
      %s209 = scalar_select %p206, %s207, %s208
      %p212 = pneg %p206
      %p213 = scmp.eq.s32.totalorder %s47, 3
      %p214 = por %p212, %p213
      %p215 = scmp.ne.s32.totalorder %s207, %s210
      %p216 = scmp.eq.s32.totalorder %s47, 0
      %p217 = por %p215, %p216
      %p218 = scmp.ne.s32.totalorder %s207, %s210
      %p219 = scmp.eq.s32.totalorder %s52, 3
      %p220 = por %p218, %p219
      %p221 = scmp.ne.s32.totalorder %s210, %s211
      %p222 = scmp.eq.s32.totalorder %s52, 0
      %p223 = por %p221, %p222
      %p224 = scmp.ne.s32.totalorder %s210, %s211
      %p225 = scmp.eq.s32.totalorder %s53, 3
      %p226 = por %p224, %p225
      %p228 = scmp.ne.s32.totalorder %s211, %s227
      %p229 = scmp.eq.s32.totalorder %s53, 0
      %p230 = por %p228, %p229
      %s231 = sadd.s32 %s47, 12
      %s232 = sld [smem:[#allocation4 + %s231]]
      %s233 = sadd.s32 %s54, 12
      %s234 = sld [smem:[#allocation4 + %s233]]
      %s235 = ssub.s32 %s232, %s234
      %p236 = scmp.eq.s32.totalorder %s235, 0
      %s238 = sadd.s32 %s237, 1
      %s239 = scalar_select %p236, %s237, %s238
      %p242 = pneg %p236
      %p243 = scmp.eq.s32.totalorder %s47, 3
      %p244 = por %p242, %p243
      %p245 = scmp.ne.s32.totalorder %s237, %s240
      %p246 = scmp.eq.s32.totalorder %s47, 0
      %p247 = por %p245, %p246
      %p248 = scmp.ne.s32.totalorder %s237, %s240
      %p249 = scmp.eq.s32.totalorder %s52, 3
      %p250 = por %p248, %p249
      %p251 = scmp.ne.s32.totalorder %s240, %s241
      %p252 = scmp.eq.s32.totalorder %s52, 0
      %p253 = por %p251, %p252
      %p254 = scmp.ne.s32.totalorder %s240, %s241
      %p255 = scmp.eq.s32.totalorder %s53, 3
      %p256 = por %p254, %p255
      %p258 = scmp.ne.s32.totalorder %s241, %s257
      %p259 = scmp.eq.s32.totalorder %s53, 0
      %p260 = por %p258, %p259
      %s261 = sadd.s32 %s47, 12
      %s262 = sld [smem:[#allocation4 + %s261]]
      %s263 = sadd.s32 %s54, 12
      %s264 = sld [smem:[#allocation4 + %s263]]
      %s265 = ssub.s32 %s262, %s264
      %p266 = scmp.eq.s32.totalorder %s265, 0
      %s268 = sadd.s32 %s267, 1
      %s269 = scalar_select %p266, %s267, %s268
      %p272 = pneg %p266
      %p273 = scmp.eq.s32.totalorder %s47, 3
      %p274 = por %p272, %p273
      %p275 = scmp.ne.s32.totalorder %s267, %s270
      %p276 = scmp.eq.s32.totalorder %s47, 0
      %p277 = por %p275, %p276
      %p278 = scmp.ne.s32.totalorder %s267, %s270
      %p279 = scmp.eq.s32.totalorder %s52, 3
      %p280 = por %p278, %p279
      %p281 = scmp.ne.s32.totalorder %s270, %s271
      %p282 = scmp.eq.s32.totalorder %s52, 0
      %p283 = por %p281, %p282
      %p284 = scmp.ne.s32.totalorder %s270, %s271
      %p285 = scmp.eq.s32.totalorder %s53, 3
      %p286 = por %p284, %p285
      %p288 = scmp.ne.s32.totalorder %s271, %s287
      %p289 = scmp.eq.s32.totalorder %s53, 0
      %p290 = por %p288, %p289
      %s291 = ssub.s32 %s47, %s54
      %p292 = scmp.eq.s32.totalorder %s291, 0
      %s294 = sadd.s32 %s293, 1
      %s295 = scalar_select %p292, %s293, %s294
      %p298 = pneg %p292
      %p299 = scmp.eq.s32.totalorder %s47, 3
      %p300 = por %p298, %p299
      %p301 = scmp.ne.s32.totalorder %s293, %s296
      %p302 = scmp.eq.s32.totalorder %s47, 0
      %p303 = por %p301, %p302
      %p304 = scmp.ne.s32.totalorder %s293, %s296
      %p305 = scmp.eq.s32.totalorder %s52, 3
      %p306 = por %p304, %p305
      %p307 = scmp.ne.s32.totalorder %s296, %s297
      %p308 = scmp.eq.s32.totalorder %s52, 0
      %p309 = por %p307, %p308
      %p310 = scmp.ne.s32.totalorder %s296, %s297
      %p311 = scmp.eq.s32.totalorder %s53, 3
      %p312 = por %p310, %p311
      %p314 = scmp.ne.s32.totalorder %s297, %s313
      %p315 = scmp.eq.s32.totalorder %s53, 0
      %p316 = por %p314, %p315
      %p317 = scmp.le.s32.totalorder 1, %s47
      %p318 = scmp.lt.s32.totalorder %s47, 5
      %p319 = pnand %p317, %p318
      %p320 = pneg %p319
      // Predicated region
      $region9: #{tpu_custom_call.1} parent=5 // pred_check
        _
      $region10: #{tpu_custom_call.1} parent=5 // pred_check_branch
        %322 = sbr.rel (%p319) target = $region12
      $region11: #{tpu_custom_call.1} parent=5 // pred_region
        %s323 = ssub.s32 %s47, 1
      $region12: #{tpu_custom_call.1} parent=5 // pred_fallthru
        _
      %p324 = scmp.lt.s32.totalorder %s47, 4
      // Predicated region
      $region13: #{tpu_custom_call.1} parent=5 // pred_check
        %p325 = pneg %p324
      $region14: #{tpu_custom_call.1} parent=5 // pred_check_branch
        %327 = sbr.rel (%p325) target = $region16
      $region15: #{tpu_custom_call.1} parent=5 // pred_region
        // Predicated region
        $region17: #{tpu_custom_call.1} parent=15 // pred_check
          %p328 = pneg %p69
        $region18: #{tpu_custom_call.1} parent=15 // pred_check_branch
          %330 = sbr.rel (%p328) target = $region20
        $region19: #{tpu_custom_call.1} parent=15 // pred_region
          %s331 = sand.u32 %s59, 1
          %s332 = scalar_lea.sflag [#allocation6], %s331
          %s333 = sand.u32 %s59, 1
          %s334 = smul.addr %s333, 48
          %s335 = scalar_lea.vmem [#allocation5], %s334
          %s336 = sld [smem:[#allocation4 + %s47]]
          %s337 = smul.u32 6, %s336
          %339 = vsyncadd %s332, 0
          %s340 = smul.addr %s337, 8
          %s341 = scalar_lea.hbm %s2, %s340
          %s342 = sshll.u32 %s341, 4
          %s343 = int_to_ptr.hbm [resolvable:$true] %s342
          %s344 = sshll.u32 %s335, 4
          %s345 = int_to_ptr.vmem [resolvable:$true] %s344
          %350 = dma.hbm_to_vmem [thread:$0]  %s343, 768, %s345, %s332, 128, 128, 8
        $region20: #{tpu_custom_call.1} parent=15 // pred_fallthru
          _
        // Predicated region
        $region21: #{tpu_custom_call.1} parent=15 // pred_check
          %p351 = pneg %p97
        $region22: #{tpu_custom_call.1} parent=15 // pred_check_branch
          %353 = sbr.rel (%p351) target = $region24
        $region23: #{tpu_custom_call.1} parent=15 // pred_region
          %s354 = sand.u32 %s47, 1
          %s355 = scalar_lea.sflag [#allocation9], %s354
          %s356 = sand.u32 %s87, 1
          %s357 = smul.addr %s356, 48
          %s358 = scalar_lea.vmem [#allocation8], %s357
          %s359 = sld [smem:[#allocation4 + %s47]]
          %s360 = smul.u32 6, %s359
          %362 = vsyncadd %s355, 0
          %s363 = smul.addr %s360, 8
          %s364 = scalar_lea.hbm %s3, %s363
          %s365 = sshll.u32 %s364, 4
          %s366 = int_to_ptr.hbm [resolvable:$true] %s365
          %s367 = sshll.u32 %s358, 4
          %s368 = int_to_ptr.vmem [resolvable:$true] %s367
          %373 = dma.hbm_to_vmem [thread:$0]  %s366, 768, %s368, %s355, 128, 128, 8
        $region24: #{tpu_custom_call.1} parent=15 // pred_fallthru
          _
        // Predicated region
        $region25: #{tpu_custom_call.1} parent=15 // pred_check
          %p374 = pneg %p127
        $region26: #{tpu_custom_call.1} parent=15 // pred_check_branch
          %376 = sbr.rel (%p374) target = $region28
        $region27: #{tpu_custom_call.1} parent=15 // pred_region
          %s377 = sand.u32 %s47, 1
          %s378 = scalar_lea.sflag [#allocation9], %s377
          %s379 = sand.u32 %s117, 1
          %s380 = smul.addr %s379, 8
          %s381 = scalar_lea.vmem [#allocation10], %s380
          %s382 = sadd.s32 %s47, 4
          %s383 = sld [smem:[#allocation4 + %s382]]
          %385 = vsyncadd %s378, 0
          %s386 = smul.addr %s383, 8
          %s387 = scalar_lea.hbm %s4, %s386
          %s389 = sshll.u32 %s387, 4
          %s390 = int_to_ptr.hbm [resolvable:$true] %s389
          %s391 = sshll.u32 %s381, 4
          %s392 = int_to_ptr.vmem [resolvable:$true] %s391
          %394 = dma.hbm_to_vmem [thread:$0]  %s390, 128, %s392, %s378
        $region28: #{tpu_custom_call.1} parent=15 // pred_fallthru
          _
        // Predicated region
        $region29: #{tpu_custom_call.1} parent=15 // pred_check
          %p395 = pneg %p157
        $region30: #{tpu_custom_call.1} parent=15 // pred_check_branch
          %397 = sbr.rel (%p395) target = $region32
        $region31: #{tpu_custom_call.1} parent=15 // pred_region
          %s398 = sand.u32 %s47, 1
          %s399 = scalar_lea.sflag [#allocation12], %s398
          %s400 = sand.u32 %s147, 1
          %s401 = smul.addr %s400, 8
          %s402 = scalar_lea.vmem [#allocation11], %s401
          %s403 = sadd.s32 %s47, 4
          %s404 = sld [smem:[#allocation4 + %s403]]
          %406 = vsyncadd %s399, 0
          %s407 = smul.addr %s404, 8
          %s408 = scalar_lea.hbm %s5, %s407
          %s410 = sshll.u32 %s408, 4
          %s411 = int_to_ptr.hbm [resolvable:$true] %s410
          %s412 = sshll.u32 %s402, 4
          %s413 = int_to_ptr.vmem [resolvable:$true] %s412
          %415 = dma.hbm_to_vmem [thread:$0]  %s411, 128, %s413, %s399
        $region32: #{tpu_custom_call.1} parent=15 // pred_fallthru
          _
        // Predicated region
        $region33: #{tpu_custom_call.1} parent=15 // pred_check
          %p416 = pneg %p187
        $region34: #{tpu_custom_call.1} parent=15 // pred_check_branch
          %418 = sbr.rel (%p416) target = $region36
        $region35: #{tpu_custom_call.1} parent=15 // pred_region
          %s419 = sand.u32 %s47, 1
          %s420 = scalar_lea.sflag [#allocation12], %s419
          %s421 = sand.u32 %s177, 1
          %s422 = smul.addr %s421, 16
          %s423 = scalar_lea.vmem [#allocation13], %s422
          %s424 = sadd.s32 %s47, 8
          %s425 = sld [smem:[#allocation4 + %s424]]
          %s426 = smul.u32 2, %s425
          %428 = vsyncadd %s420, 0
          %s429 = smul.addr %s426, 8
          %s430 = scalar_lea.hbm %s6, %s429
          %s431 = sshll.u32 %s430, 4
          %s432 = int_to_ptr.hbm [resolvable:$true] %s431
          %s433 = sshll.u32 %s423, 4
          %s434 = int_to_ptr.vmem [resolvable:$true] %s433
          %439 = dma.hbm_to_vmem [thread:$0]  %s432, 256, %s434, %s420, 128, 128, 8
        $region36: #{tpu_custom_call.1} parent=15 // pred_fallthru
          _
        // Predicated region
        $region37: #{tpu_custom_call.1} parent=15 // pred_check
          %p440 = pneg %p217
        $region38: #{tpu_custom_call.1} parent=15 // pred_check_branch
          %442 = sbr.rel (%p440) target = $region40
        $region39: #{tpu_custom_call.1} parent=15 // pred_region
          %s443 = sand.u32 %s47, 1
          %s444 = scalar_lea.sflag [#allocation15], %s443
          %s445 = sand.u32 %s207, 1
          %s446 = smul.addr %s445, 16
          %s447 = scalar_lea.vmem [#allocation14], %s446
          %s448 = sadd.s32 %s47, 8
          %s449 = sld [smem:[#allocation4 + %s448]]
          %s450 = smul.u32 2, %s449
          %452 = vsyncadd %s444, 0
          %s453 = smul.addr %s450, 8
          %s454 = scalar_lea.hbm %s7, %s453
          %s455 = sshll.u32 %s454, 4
          %s456 = int_to_ptr.hbm [resolvable:$true] %s455
          %s457 = sshll.u32 %s447, 4
          %s458 = int_to_ptr.vmem [resolvable:$true] %s457
          %463 = dma.hbm_to_vmem [thread:$0]  %s456, 256, %s458, %s444, 128, 128, 8
        $region40: #{tpu_custom_call.1} parent=15 // pred_fallthru
          _
        // Predicated region
        $region41: #{tpu_custom_call.1} parent=15 // pred_check
          %p464 = pneg %p247
        $region42: #{tpu_custom_call.1} parent=15 // pred_check_branch
          %466 = sbr.rel (%p464) target = $region44
        $region43: #{tpu_custom_call.1} parent=15 // pred_region
          %s467 = sand.u32 %s47, 1
          %s468 = scalar_lea.sflag [#allocation15], %s467
          %s469 = sand.u32 %s237, 1
          %s470 = smul.addr %s469, 48
          %s471 = scalar_lea.vmem [#allocation16], %s470
          %s472 = sadd.s32 %s47, 12
          %s473 = sld [smem:[#allocation4 + %s472]]
          %s474 = smul.u32 6, %s473
          %476 = vsyncadd %s468, 0
          %s477 = smul.addr %s474, 8
          %s478 = scalar_lea.hbm %s8, %s477
          %s479 = sshll.u32 %s478, 4
          %s480 = int_to_ptr.hbm [resolvable:$true] %s479
          %s481 = sshll.u32 %s471, 4
          %s482 = int_to_ptr.vmem [resolvable:$true] %s481
          %487 = dma.hbm_to_vmem [thread:$0]  %s480, 768, %s482, %s468, 128, 128, 8
        $region44: #{tpu_custom_call.1} parent=15 // pred_fallthru
          _
        // Predicated region
        $region45: #{tpu_custom_call.1} parent=15 // pred_check
          %p488 = pneg %p277
        $region46: #{tpu_custom_call.1} parent=15 // pred_check_branch
          %490 = sbr.rel (%p488) target = $region48
        $region47: #{tpu_custom_call.1} parent=15 // pred_region
          %s491 = sand.u32 %s267, 1
          %s492 = scalar_lea.sflag [#allocation18], %s491
          %s493 = sand.u32 %s267, 1
          %s494 = smul.addr %s493, 48
          %s495 = scalar_lea.vmem [#allocation17], %s494
          %s496 = sadd.s32 %s47, 12
          %s497 = sld [smem:[#allocation4 + %s496]]
          %s498 = smul.u32 6, %s497
          %500 = vsyncadd %s492, 0
          %s501 = smul.addr %s498, 8
          %s502 = scalar_lea.hbm %s9, %s501
          %s503 = sshll.u32 %s502, 4
          %s504 = int_to_ptr.hbm [resolvable:$true] %s503
          %s505 = sshll.u32 %s495, 4
          %s506 = int_to_ptr.vmem [resolvable:$true] %s505
          %511 = dma.hbm_to_vmem [thread:$0]  %s504, 768, %s506, %s492, 128, 128, 8
        $region48: #{tpu_custom_call.1} parent=15 // pred_fallthru
          _
      $region16: #{tpu_custom_call.1} parent=5 // pred_fallthru
        _
      %p512 = scmp.le.s32.totalorder 1, %s47
      %p513 = scmp.lt.s32.totalorder %s47, 5
      %p514 = pnand %p512, %p513
      %p515 = pneg %p514
      // Predicated region
      $region49: #{tpu_custom_call.1} parent=5 // pred_check
        _
      $region50: #{tpu_custom_call.1} parent=5 // pred_check_branch
        %517 = sbr.rel (%p514) target = $region52
      $region51: #{tpu_custom_call.1} parent=5 // pred_region
        %s518 = ssub.s32 %s47, 1
        %s519 = sand.u32 %s62, 1
        %s520 = scalar_lea.sflag [#allocation6], %s519
        %s521 = sand.u32 %s62, 1
        %s522 = smul.addr %s521, 48
        %s523 = scalar_lea.vmem [#allocation5], %s522
        // Predicated region
        $region53: #{tpu_custom_call.1} parent=51 // pred_check
          %p524 = pneg %p75
        $region54: #{tpu_custom_call.1} parent=51 // pred_check_branch
          %526 = sbr.rel (%p524) target = $region56
        $region55: #{tpu_custom_call.1} parent=51 // pred_region
          %528 = dma.done %s520, 768
        $region56: #{tpu_custom_call.1} parent=51 // pred_fallthru
          _
        %s529 = sand.u32 %s52, 1
        %s530 = scalar_lea.sflag [#allocation9], %s529
        %s531 = sand.u32 %s90, 1
        %s532 = smul.addr %s531, 48
        %s533 = scalar_lea.vmem [#allocation8], %s532
        // Predicated region
        $region57: #{tpu_custom_call.1} parent=51 // pred_check
          %p534 = pneg %p103
        $region58: #{tpu_custom_call.1} parent=51 // pred_check_branch
          %536 = sbr.rel (%p534) target = $region60
        $region59: #{tpu_custom_call.1} parent=51 // pred_region
          %538 = dma.done %s530, 768
        $region60: #{tpu_custom_call.1} parent=51 // pred_fallthru
          _
        %s539 = sand.u32 %s52, 1
        %s540 = scalar_lea.sflag [#allocation9], %s539
        %s541 = sand.u32 %s120, 1
        %s542 = smul.addr %s541, 8
        %s543 = scalar_lea.vmem [#allocation10], %s542
        // Predicated region
        $region61: #{tpu_custom_call.1} parent=51 // pred_check
          %p544 = pneg %p133
        $region62: #{tpu_custom_call.1} parent=51 // pred_check_branch
          %546 = sbr.rel (%p544) target = $region64
        $region63: #{tpu_custom_call.1} parent=51 // pred_region
          %548 = dma.done %s540, 128
        $region64: #{tpu_custom_call.1} parent=51 // pred_fallthru
          _
        %s549 = sand.u32 %s52, 1
        %s550 = scalar_lea.sflag [#allocation12], %s549
        %s551 = sand.u32 %s150, 1
        %s552 = smul.addr %s551, 8
        %s553 = scalar_lea.vmem [#allocation11], %s552
        // Predicated region
        $region65: #{tpu_custom_call.1} parent=51 // pred_check
          %p554 = pneg %p163
        $region66: #{tpu_custom_call.1} parent=51 // pred_check_branch
          %556 = sbr.rel (%p554) target = $region68
        $region67: #{tpu_custom_call.1} parent=51 // pred_region
          %558 = dma.done %s550, 128
        $region68: #{tpu_custom_call.1} parent=51 // pred_fallthru
          _
        %s559 = sand.u32 %s52, 1
        %s560 = scalar_lea.sflag [#allocation12], %s559
        %s561 = sand.u32 %s180, 1
        %s562 = smul.addr %s561, 16
        %s563 = scalar_lea.vmem [#allocation13], %s562
        // Predicated region
        $region69: #{tpu_custom_call.1} parent=51 // pred_check
          %p564 = pneg %p193
        $region70: #{tpu_custom_call.1} parent=51 // pred_check_branch
          %566 = sbr.rel (%p564) target = $region72
        $region71: #{tpu_custom_call.1} parent=51 // pred_region
          %568 = dma.done %s560, 256
        $region72: #{tpu_custom_call.1} parent=51 // pred_fallthru
          _
        %s569 = sand.u32 %s52, 1
        %s570 = scalar_lea.sflag [#allocation15], %s569
        %s571 = sand.u32 %s210, 1
        %s572 = smul.addr %s571, 16
        %s573 = scalar_lea.vmem [#allocation14], %s572
        // Predicated region
        $region73: #{tpu_custom_call.1} parent=51 // pred_check
          %p574 = pneg %p223
        $region74: #{tpu_custom_call.1} parent=51 // pred_check_branch
          %576 = sbr.rel (%p574) target = $region76
        $region75: #{tpu_custom_call.1} parent=51 // pred_region
          %578 = dma.done %s570, 256
        $region76: #{tpu_custom_call.1} parent=51 // pred_fallthru
          _
        %s579 = sand.u32 %s52, 1
        %s580 = scalar_lea.sflag [#allocation15], %s579
        %s581 = sand.u32 %s240, 1
        %s582 = smul.addr %s581, 48
        %s583 = scalar_lea.vmem [#allocation16], %s582
        // Predicated region
        $region77: #{tpu_custom_call.1} parent=51 // pred_check
          %p584 = pneg %p253
        $region78: #{tpu_custom_call.1} parent=51 // pred_check_branch
          %586 = sbr.rel (%p584) target = $region80
        $region79: #{tpu_custom_call.1} parent=51 // pred_region
          %588 = dma.done %s580, 768
        $region80: #{tpu_custom_call.1} parent=51 // pred_fallthru
          _
        %s589 = sand.u32 %s270, 1
        %s590 = scalar_lea.sflag [#allocation18], %s589
        %s591 = sand.u32 %s270, 1
        %s592 = smul.addr %s591, 48
        %s593 = scalar_lea.vmem [#allocation17], %s592
        // Predicated region
        $region81: #{tpu_custom_call.1} parent=51 // pred_check
          %p594 = pneg %p283
        $region82: #{tpu_custom_call.1} parent=51 // pred_check_branch
          %596 = sbr.rel (%p594) target = $region84
        $region83: #{tpu_custom_call.1} parent=51 // pred_region
          %598 = dma.done %s590, 768
        $region84: #{tpu_custom_call.1} parent=51 // pred_fallthru
          _
        %s599 = sand.u32 %s62, 1
        %s600 = scalar_lea.sflag [#allocation6], %s599
        %s601 = sand.u32 %s62, 1
        %s602 = smul.addr %s601, 48
        %s603 = scalar_lea.vmem [#allocation5], %s602
        %p604 = pneg %p75
        %p605 = pneg %p72
        %s606 = sand.u32 %s52, 1
        %s607 = scalar_lea.sflag [#allocation9], %s606
        %s608 = sand.u32 %s90, 1
        %s609 = smul.addr %s608, 48
        %s610 = scalar_lea.vmem [#allocation8], %s609
        %p611 = pneg %p103
        %p612 = pneg %p100
        %s613 = sand.u32 %s52, 1
        %s614 = scalar_lea.sflag [#allocation9], %s613
        %s615 = sand.u32 %s120, 1
        %s616 = smul.addr %s615, 8
        %s617 = scalar_lea.vmem [#allocation10], %s616
        %p618 = pneg %p133
        %p619 = pneg %p130
        %s620 = sand.u32 %s52, 1
        %s621 = scalar_lea.sflag [#allocation12], %s620
        %s622 = sand.u32 %s150, 1
        %s623 = smul.addr %s622, 8
        %s624 = scalar_lea.vmem [#allocation11], %s623
        %p625 = pneg %p163
        %p626 = pneg %p160
        %s627 = sand.u32 %s52, 1
        %s628 = scalar_lea.sflag [#allocation12], %s627
        %s629 = sand.u32 %s180, 1
        %s630 = smul.addr %s629, 16
        %s631 = scalar_lea.vmem [#allocation13], %s630
        %p632 = pneg %p193
        %p633 = pneg %p190
        %s634 = sand.u32 %s52, 1
        %s635 = scalar_lea.sflag [#allocation15], %s634
        %s636 = sand.u32 %s210, 1
        %s637 = smul.addr %s636, 16
        %s638 = scalar_lea.vmem [#allocation14], %s637
        %p639 = pneg %p223
        %p640 = pneg %p220
        %s641 = sand.u32 %s52, 1
        %s642 = scalar_lea.sflag [#allocation15], %s641
        %s643 = sand.u32 %s240, 1
        %s644 = smul.addr %s643, 48
        %s645 = scalar_lea.vmem [#allocation16], %s644
        %p646 = pneg %p253
        %p647 = pneg %p250
        %s648 = sand.u32 %s270, 1
        %s649 = scalar_lea.sflag [#allocation18], %s648
        %s650 = sand.u32 %s270, 1
        %s651 = smul.addr %s650, 48
        %s652 = scalar_lea.vmem [#allocation17], %s651
        %p653 = pneg %p283
        %p654 = pneg %p280
        %p655 = pneg %p309
        %p656 = pneg %p306
        %s657 = sand.u32 %s296, 1
        %s658 = scalar_lea.sflag [#allocation7], %s657
        %s659 = sand.u32 %s296, 1
        %s660 = smul.addr %s659, 8
        %s661 = scalar_lea.vmem [#allocation19], %s660
        %s662 = sld [smem:[#allocation4 + %s52]]
        %s663 = smul.u32 6, %s662
        %s664 = sld [smem:[#allocation4 + %s52]]
        %s665 = smul.u32 6, %s664
        %s666 = sadd.s32 %s52, 4
        %s667 = sld [smem:[#allocation4 + %s666]]
        %s668 = sadd.s32 %s52, 4
        %s669 = sld [smem:[#allocation4 + %s668]]
        %s670 = sadd.s32 %s52, 8
        %s671 = sld [smem:[#allocation4 + %s670]]
        %s672 = smul.u32 2, %s671
        %s673 = sadd.s32 %s52, 8
        %s674 = sld [smem:[#allocation4 + %s673]]
        %s675 = smul.u32 2, %s674
        %s676 = sadd.s32 %s52, 12
        %s677 = sld [smem:[#allocation4 + %s676]]
        %s678 = smul.u32 6, %s677
        %s679 = sadd.s32 %s52, 12
        %s680 = sld [smem:[#allocation4 + %s679]]
        %s681 = smul.u32 6, %s680
        %s682 = sld [smem:[#allocation3 + %s52]]
        %p683 = scmp.eq.s32.totalorder %s682, 0
        // Predicated region
        $region85: #{tpu_custom_call.1} parent=51 // pred_check
          %p684 = pneg %p683
        $region86: #{tpu_custom_call.1} parent=51 // pred_check_branch
          %686 = sbr.rel (%p684) target = $region88
        $region87: #{tpu_custom_call.1} parent=51 // pred_region
          %v687 = vld [vmem:[%s523] sm:$0xff]
          %v688 = vld [vmem:[%s523 + $0x8] sm:$0xff]
          %v689 = vld [vmem:[%s523 + $0x10] sm:$0xff]
          %v690 = vld [vmem:[%s523 + $0x18] sm:$0xff]
          %v691 = vld [vmem:[%s523 + $0x20] sm:$0xff]
          %v692 = vld [vmem:[%s523 + $0x28] sm:$0xff]
          %v693 = vld [vmem:[%s533] sm:$0xff]
          %v694 = vld [vmem:[%s533 + $0x8] sm:$0xff]
          %v695 = vld [vmem:[%s533 + $0x10] sm:$0xff]
          %v696 = vld [vmem:[%s533 + $0x18] sm:$0xff]
          %v697 = vld [vmem:[%s533 + $0x20] sm:$0xff]
          %v698 = vld [vmem:[%s533 + $0x28] sm:$0xff]
          %v699 = vsub.f32 %v687, %v693
          %v700 = vsub.f32 %v688, %v694
          %v701 = vsub.f32 %v689, %v695
          %v702 = vsub.f32 %v690, %v696
          %v703 = vsub.f32 %v691, %v697
          %v704 = vsub.f32 %v692, %v698
          %v705 = vmul.f32 %v699, %v699
          %v706 = vmul.f32 %v700, %v700
          %v707 = vmul.f32 %v701, %v701
          %v708 = vmul.f32 %v702, %v702
          %v709 = vmul.f32 %v703, %v703
          %v710 = vmul.f32 %v704, %v704
          %v711 = vadd.f32 %v705, %v706
          %v712 = vadd.f32 %v711, %v707
          %v713 = vadd.f32 %v712, %v708
          %v714 = vadd.f32 %v713, %v709
          %v715 = vadd.f32 %v714, %v710
          %716 = vst [vmem:[%s661] sm:$0xff] %v715
        $region88: #{tpu_custom_call.1} parent=51 // pred_fallthru
          _
        %p717 = scmp.eq.s32.totalorder %s682, 1
        // Predicated region
        $region89: #{tpu_custom_call.1} parent=51 // pred_check
          %p718 = pneg %p717
        $region90: #{tpu_custom_call.1} parent=51 // pred_check_branch
          %720 = sbr.rel (%p718) target = $region92
        $region91: #{tpu_custom_call.1} parent=51 // pred_region
          %v721 = vld [vmem:[%s543] sm:$0xff]
          %v722 = vld [vmem:[%s553] sm:$0xff]
          %v723 = vsub.f32 %v721, %v722
          %v724 = vmul.f32 %v723, %v723
          %v725 = vadd.f32 %v724, 0.0
          %726 = vst [vmem:[%s661] sm:$0xff] %v725
        $region92: #{tpu_custom_call.1} parent=51 // pred_fallthru
          _
        %p727 = scmp.eq.s32.totalorder %s682, 2
        // Predicated region
        $region93: #{tpu_custom_call.1} parent=51 // pred_check
          %p728 = pneg %p727
        $region94: #{tpu_custom_call.1} parent=51 // pred_check_branch
          %730 = sbr.rel (%p728) target = $region96
        $region95: #{tpu_custom_call.1} parent=51 // pred_region
          %v731 = vld [vmem:[%s563] sm:$0xff]
          %v732 = vld [vmem:[%s563 + $0x8] sm:$0xff]
          %v733 = vld [vmem:[%s573] sm:$0xff]
          %v734 = vld [vmem:[%s573 + $0x8] sm:$0xff]
          %v735 = vsub.f32 %v731, %v733
          %v736 = vsub.f32 %v732, %v734
          %v737 = vmul.f32 %v735, %v735
          %v738 = vmul.f32 %v736, %v736
          %v739 = vadd.f32 %v737, %v738
          %740 = vst [vmem:[%s661] sm:$0xff] %v739
        $region96: #{tpu_custom_call.1} parent=51 // pred_fallthru
          _
        %p741 = scmp.eq.s32.totalorder %s682, 3
        // Predicated region
        $region97: #{tpu_custom_call.1} parent=51 // pred_check
          %p742 = pneg %p741
        $region98: #{tpu_custom_call.1} parent=51 // pred_check_branch
          %744 = sbr.rel (%p742) target = $region100
        $region99: #{tpu_custom_call.1} parent=51 // pred_region
          %v745 = vld [vmem:[%s583] sm:$0xff]
          %v746 = vld [vmem:[%s583 + $0x8] sm:$0xff]
          %v747 = vld [vmem:[%s583 + $0x10] sm:$0xff]
          %v748 = vld [vmem:[%s583 + $0x18] sm:$0xff]
          %v749 = vld [vmem:[%s583 + $0x20] sm:$0xff]
          %v750 = vld [vmem:[%s583 + $0x28] sm:$0xff]
          %v751 = vld [vmem:[%s593] sm:$0xff]
          %v752 = vld [vmem:[%s593 + $0x8] sm:$0xff]
          %v753 = vld [vmem:[%s593 + $0x10] sm:$0xff]
          %v754 = vld [vmem:[%s593 + $0x18] sm:$0xff]
          %v755 = vld [vmem:[%s593 + $0x20] sm:$0xff]
          %v756 = vld [vmem:[%s593 + $0x28] sm:$0xff]
          %v757 = vsub.f32 %v745, %v751
          %v758 = vsub.f32 %v746, %v752
          %v759 = vsub.f32 %v747, %v753
          %v760 = vsub.f32 %v748, %v754
          %v761 = vsub.f32 %v749, %v755
          %v762 = vsub.f32 %v750, %v756
          %v763 = vmul.f32 %v757, %v757
          %v764 = vmul.f32 %v758, %v758
          %v765 = vmul.f32 %v759, %v759
          %v766 = vmul.f32 %v760, %v760
          %v767 = vmul.f32 %v761, %v761
          %v768 = vmul.f32 %v762, %v762
          %v769 = vadd.f32 %v763, %v764
          %v770 = vadd.f32 %v769, %v765
          %v771 = vadd.f32 %v770, %v766
          %v772 = vadd.f32 %v771, %v767
          %v773 = vadd.f32 %v772, %v768
          %774 = vst [vmem:[%s661] sm:$0xff] %v773
        $region100: #{tpu_custom_call.1} parent=51 // pred_fallthru
          _
        %s775 = sand.u32 %s296, 1
        %s776 = scalar_lea.sflag [#allocation7], %s775
        %s777 = sand.u32 %s296, 1
        %s778 = smul.addr %s777, 8
        %s779 = scalar_lea.vmem [#allocation19], %s778
        // Predicated region
        $region101: #{tpu_custom_call.1} parent=51 // pred_check
          %p780 = pneg %p306
        $region102: #{tpu_custom_call.1} parent=51 // pred_check_branch
          %782 = sbr.rel (%p780) target = $region104
        $region103: #{tpu_custom_call.1} parent=51 // pred_region
          %784 = vsyncadd %s776, 0
          %s785 = smul.addr %s52, 8
          %s786 = scalar_lea.hbm %s10, %s785
          %s788 = sshll.u32 %s779, 4
          %s789 = int_to_ptr.vmem [resolvable:$true] %s788
          %s790 = sshll.u32 %s786, 4
          %s791 = int_to_ptr.hbm [resolvable:$true] %s790
          %793 = dma.vmem_to_hbm [thread:$0]  %s789, 128, %s791, %s776
        $region104: #{tpu_custom_call.1} parent=51 // pred_fallthru
          _
      $region52: #{tpu_custom_call.1} parent=5 // pred_fallthru
        _
      %p794 = scmp.le.s32.totalorder 2, %s47
      // Predicated region
      $region105: #{tpu_custom_call.1} parent=5 // pred_check
        %p795 = pneg %p794
      $region106: #{tpu_custom_call.1} parent=5 // pred_check_branch
        %797 = sbr.rel (%p795) target = $region108
      $region107: #{tpu_custom_call.1} parent=5 // pred_region
        %s798 = ssub.s32 %s47, 2
        // Predicated region
        $region109: #{tpu_custom_call.1} parent=107 // pred_check
          %p799 = pneg %p312
        $region110: #{tpu_custom_call.1} parent=107 // pred_check_branch
          %801 = sbr.rel (%p799) target = $region112
        $region111: #{tpu_custom_call.1} parent=107 // pred_region
          %s802 = sand.u32 %s297, 1
          %s803 = scalar_lea.sflag [#allocation7], %s802
          %s804 = sand.u32 %s297, 1
          %s805 = smul.addr %s804, 8
          %s806 = scalar_lea.vmem [#allocation19], %s805
          %808 = dma.done %s803, 128
        $region112: #{tpu_custom_call.1} parent=107 // pred_fallthru
          _
      $region108: #{tpu_custom_call.1} parent=5 // pred_fallthru
        _
    $region6: #{tpu_custom_call.1} parent=1 // loop_footer
      %s51 = sadd.s32 1, %s47
    $region7: #{tpu_custom_call.1} parent=1 // loop_footer_branch
      %46 = sbr.rel target = $region3
    $region8: #{tpu_custom_call.1} parent=1 // loop_exit
      _
    %809 = vsyncpa [#allocation6], 1
    %s810 = scalar_lea.sflag [#allocation6], 1
    %811 = vsyncpa %s810, 1
    %812 = vsyncpa [#allocation9], 1
    %s813 = scalar_lea.sflag [#allocation9], 1
    %814 = vsyncpa %s813, 1
    %815 = vsyncpa [#allocation12], 1
    %s816 = scalar_lea.sflag [#allocation12], 1
    %817 = vsyncpa %s816, 1
    %818 = vsyncpa [#allocation15], 1
    %s819 = scalar_lea.sflag [#allocation15], 1
    %820 = vsyncpa %s819, 1
    %821 = vsyncpa [#allocation18], 1
    %s822 = scalar_lea.sflag [#allocation18], 1
    %823 = vsyncpa %s822, 1
    %824 = vsyncpa [#allocation7], 1
    %s825 = scalar_lea.sflag [#allocation7], 1
    %826 = vsyncpa %s825, 1

</llo_original>
